<compile_context>
chip_gen: v6e
topology: v6e:2x2x1
jax: 0.10.0
libtpu: 0.0.40
codegen_flags: <defaults>
</compile_context>

<pallas_src>
import functools

import jax
import jax.numpy as jnp
from jax import lax
from jax.experimental import pallas as pl
from jax.experimental.pallas import tpu as pltpu


def _round_up(x, m):
    return ((x + m - 1) // m) * m


def _vmem_capacity_bytes():
    try:
        return int(pltpu.get_tpu_info().vmem_capacity_bytes)
    except Exception:
        # Conservative fallback (v7x has the smallest VMEM: 64 MiB).
        return 64 * 1024 * 1024


# --------------------------------------------------------------------------
# Kernel: per row-tile, loop over hidden-dim chunks, accumulate fc2 into a
# resident f32 VMEM scratch.  Weights are full-size, resident, single-buffered.
# --------------------------------------------------------------------------
def _mlp_kernel(x_ref, w1_ref, b1_ref, w2_ref, b2_ref, o_ref, acc_ref,
                *, h_chunk, n_chunks, approximate):
    x = x_ref[...]                                   # (tm, Din_p) bf16

    # Initialize the accumulator with the fc2 bias (broadcast over rows).
    acc_ref[...] = jnp.broadcast_to(b2_ref[...], acc_ref.shape)

    def one_chunk(start):
        # fc1 chunk: (tm, Din_p) @ (Din_p, h_chunk) -> f32 MXU accumulation.
        w1c = w1_ref[:, pl.ds(start, h_chunk)]
        h = jnp.dot(x, w1c, preferred_element_type=jnp.float32)
        h = h + b1_ref[:, pl.ds(start, h_chunk)]     # bias add in f32
        if approximate:
            # tanh-approx GELU on the EUP, elementwise math in bf16
            # (faster on v6e/v7x; not bit-identical to PyTorch nn.GELU()).
            hb = jax.nn.gelu(h.astype(w2_ref.dtype), approximate=True)
        else:
            # Exact (erf) GELU in f32 — matches PyTorch nn.GELU() default.
            h = 0.5 * h * (1.0 + lax.erf(h * 0.7071067811865476))
            hb = h.astype(w2_ref.dtype)
        # drop1: p = 0.0 -> identity.
        # fc2 chunk: (tm, h_chunk) bf16 @ (h_chunk, Dout_p) bf16 -> f32 acc.
        w2c = w2_ref[pl.ds(start, h_chunk), :]
        acc_ref[...] += jnp.dot(hb, w2c, preferred_element_type=jnp.float32)

    if n_chunks == 1:
        one_chunk(0)
    else:
        def body(c, carry):
            one_chunk(pl.multiple_of(c * h_chunk, 128))
            return carry
        lax.fori_loop(0, n_chunks, body, 0)

    # drop2: p = 0.0 -> identity.
    # TODO(synk): dropout with p > 0 (training mode) would need pltpu.prng_* masking.
    o_ref[...] = acc_ref[...].astype(o_ref.dtype)


# --------------------------------------------------------------------------
# One-time parameter preparation (call at model load, NOT per forward pass):
# pad feature dims to multiples of 128 (lane-dense, full MXU tiles) and cast
# the weights to the bf16 MXU compute dtype.  Zero padding keeps the math
# exact: padded x columns hit zero rows of w1; padded hidden columns carry
# b1_pad = 0 so GELU(0) = 0 and hit zero rows of w2; padded output columns
# are sliced off (only when padding was actually added).
# --------------------------------------------------------------------------
def prepare_mlp_params(w1, b1, w2, b2, *, compute_dtype=jnp.bfloat16):
    din, hid = w1.shape
    dout = w2.shape[1]
    din_p = _round_up(din, 128)
    hid_p = _round_up(hid, 128)
    dout_p = _round_up(dout, 128)
    w1p = jnp.pad(jnp.asarray(w1, compute_dtype), ((0, din_p - din), (0, hid_p - hid)))
    w2p = jnp.pad(jnp.asarray(w2, compute_dtype), ((0, hid_p - hid), (0, dout_p - dout)))
    b1p = jnp.pad(jnp.asarray(b1, jnp.float32).reshape(1, -1), ((0, 0), (0, hid_p - hid)))
    b2p = jnp.pad(jnp.asarray(b2, jnp.float32).reshape(1, -1), ((0, 0), (0, dout_p - dout)))
    return (w1p, b1p, w2p, b2p), (din, hid, dout)


@functools.partial(
    jax.jit,
    static_argnames=("din", "dout", "tm", "approximate_gelu",
                     "out_dtype", "single_buffer_weights"))
def mlp_pallas(x, w1p, b1p, w2p, b2p, *, din, dout, tm=512,
               approximate_gelu=False, out_dtype=None,
               single_buffer_weights=True):
    """Fused fc1 + GELU + fc2 (dropout p=0).

    x : (M, din) unpadded activations.  w1p/b1p/w2p/b2p come from
    `prepare_mlp_params` (128-padded, bf16 weights / f32 biases).
    tm=512 is the default row tile; it is auto-reduced if the tile plan
    would not fit the chip's VMEM (queried via pltpu.get_tpu_info()).
    """
    out_dtype = x.dtype if out_dtype is None else jnp.dtype(out_dtype)
    out_isize = jnp.dtype(out_dtype).itemsize
    compute_dtype = w1p.dtype

    M = x.shape[0]
    din_p, hid_p = w1p.shape
    dout_p = w2p.shape[1]

    # Hidden-dim chunk: largest multiple of 128 that is <= 512 and divides H_p.
    h_chunk = 128
    for cand in (512, 384, 256, 128):
        if hid_p % cand == 0:
            h_chunk = cand
            break
    n_chunks = hid_p // h_chunk

    # Row (token) tile: largest <= tm without over-padding tiny inputs; shrink
    # if the tile plan would exceed the generation-aware VMEM budget.
    tm_eff = min(tm, _round_up(M, 8))

    def bytes_needed(tme):
        return (
            2 * tme * din_p * 2                      # x tile, double-buffered bf16
            + 2 * tme * dout_p * out_isize           # out tile, double-buffered
            + (din_p * hid_p + hid_p * dout_p) * 2   # resident bf16 weights
            + (hid_p + dout_p) * 4                   # resident f32 biases
            + tme * dout_p * 4                       # f32 accumulator scratch
            + tme * h_chunk * (4 + 2)                # per-chunk f32 hidden + bf16 recast
        )

    vmem_cap = int(0.85 * _vmem_capacity_bytes())
    while bytes_needed(tm_eff) > vmem_cap and tm_eff > 128:
        tm_eff = max(128, tm_eff // 2)
    vmem_limit = int(min(vmem_cap,
                         max(bytes_needed(tm_eff) * 1.25, 32 * 1024 * 1024)))

    M_p = _round_up(M, tm_eff)

    # Per-call activation padding/casting only (weights were prepared once).
    xp = x if x.dtype == compute_dtype else x.astype(compute_dtype)
    if (M_p, din_p) != (M, din):
        xp = jnp.pad(xp, ((0, M_p - M), (0, din_p - din)))

    # Grid-invariant weights/biases: single-buffer them (never re-fetched).
    def wspec(shape):
        if single_buffer_weights:
            return pl.BlockSpec(shape, lambda i: (0, 0),
                                pipeline_mode=pl.Buffered(1))
        return pl.BlockSpec(shape, lambda i: (0, 0))

    kernel = functools.partial(_mlp_kernel, h_chunk=h_chunk,
                               n_chunks=n_chunks,
                               approximate=approximate_gelu)

    cost = pl.CostEstimate(
        flops=2 * M_p * din_p * hid_p + 2 * M_p * hid_p * dout_p,
        transcendentals=M_p * hid_p,
        bytes_accessed=int(M_p * din_p * 2
                           + (din_p * hid_p + hid_p * dout_p) * 2
                           + (hid_p + dout_p) * 4
                           + M_p * dout_p * out_isize),
    )

    out = pl.pallas_call(
        kernel,
        out_shape=jax.ShapeDtypeStruct((M_p, dout_p), out_dtype),
        grid_spec=pltpu.PrefetchScalarGridSpec(
            num_scalar_prefetch=0,
            grid=(M_p // tm_eff,),
            in_specs=[
                pl.BlockSpec((tm_eff, din_p), lambda i: (i, 0)),   # x row tile
                wspec((din_p, hid_p)),                             # w1 resident
                wspec((1, hid_p)),                                 # b1
                wspec((hid_p, dout_p)),                            # w2 resident
                wspec((1, dout_p)),                                # b2
            ],
            out_specs=pl.BlockSpec((tm_eff, dout_p), lambda i: (i, 0)),
            scratch_shapes=[pltpu.VMEM((tm_eff, dout_p), jnp.float32)],
        ),
        compiler_params=pltpu.CompilerParams(
            dimension_semantics=("parallel",),   # shard token tiles across TCs
            vmem_limit_bytes=vmem_limit,
        ),
        cost_estimate=cost,
    )(xp, w1p, b1p, w2p, b2p)

    # Slice only when padding was actually added (avoids an extra HBM copy
    # on the common Swin stages where M and C are already aligned).
    if (M_p, dout_p) != (M, dout):
        out = out[:M, :dout]
    return out
    # TODO(synk): optional fp8 weight/activation path for the MXU-bound C=768
    # stage on v7x (needs an accuracy check; not applicable to v5e/v6e).


def mlp_reference(x, w1, b1, w2, b2):
    h = x @ w1 + b1
    h = 0.5 * h * (1.0 + lax.erf(h / jnp.sqrt(2.0)))
    return h @ w2 + b2


if __name__ == "__main__":
    # Small shapes consistent with the module: tokens = B*N, channels = C.
    B, N = 2, 8                  # batch=2, seq=8 -> 16 tokens
    in_features = 32
    hidden_features = 64
    out_features = in_features

    key = jax.random.PRNGKey(0)
    kx, kw1, kb1, kw2, kb2 = jax.random.split(key, 5)

    x = jax.random.normal(kx, (B * N, in_features), dtype=jnp.float32)

    # Deterministic parameter init (nn.Linear-style uniform bounds).
    bound1 = 1.0 / jnp.sqrt(in_features)
    w1 = jax.random.uniform(kw1, (in_features, hidden_features),
                            minval=-bound1, maxval=bound1, dtype=jnp.float32)
    b1 = jax.random.uniform(kb1, (1, hidden_features),
                            minval=-bound1, maxval=bound1, dtype=jnp.float32)

    bound2 = 1.0 / jnp.sqrt(hidden_features)
    w2 = jax.random.uniform(kw2, (hidden_features, out_features),
                            minval=-bound2, maxval=bound2, dtype=jnp.float32)
    b2 = jax.random.uniform(kb2, (1, out_features),
                            minval=-bound2, maxval=bound2, dtype=jnp.float32)

    # One-time (model-load) padding + bf16 cast of the parameters.
    params, (din, hid, dout) = prepare_mlp_params(w1, b1, w2, b2)

    try:
        out = mlp_pallas(x, *params, din=din, dout=dout)
        jax.block_until_ready(out)
    except (TypeError, NotImplementedError, pltpu.LoweringException):
        # pl.Buffered(1) (single-buffered resident weights) may not be
        # supported by every jax version; fall back to default buffering.
        out = mlp_pallas(x, *params, din=din, dout=dout,
                         single_buffer_weights=False)
        jax.block_until_ready(out)

    ref = mlp_reference(x, w1, b1, w2, b2)
    assert out.shape == (B * N, out_features)
    # bf16 matmul inputs (f32 accumulation) -> loosen tolerance vs f32 reference.
    assert jnp.allclose(out, ref, atol=5e-2, rtol=5e-2), "mismatch vs reference"

    print("KERNEL_OK")
</pallas_src>

<mosaic_0001>
module attributes {stable_mosaic.version = 11 : i64} {
  func.func @_mlp_kernel(%arg0: i32, %arg1: memref<16x128xbf16, #tpu.memory_space<vmem>>, %arg2: memref<128x128xbf16, #tpu.memory_space<vmem>>, %arg3: memref<1x128xf32, #tpu.memory_space<vmem>>, %arg4: memref<128x128xbf16, #tpu.memory_space<vmem>>, %arg5: memref<1x128xf32, #tpu.memory_space<vmem>>, %arg6: memref<16x128xf32, #tpu.memory_space<vmem>>, %arg7: memref<16x128xf32, #tpu.memory_space<vmem>>) attributes {dimension_semantics = [#tpu.dimension_semantics<parallel>], iteration_bounds = array<i64: 1>, scalar_prefetch = 0 : i64, scratch_operands = 1 : i64, tpu.core_type = #tpu.core_type<tc>, window_params = [{transform_indices = @transform_0, window_bounds = array<i64: 16, 128>}, {pipeline_mode = #tpu.pipeline_mode<synchronous>, transform_indices = @transform_1, window_bounds = array<i64: 128, 128>}, {pipeline_mode = #tpu.pipeline_mode<synchronous>, transform_indices = @transform_2, window_bounds = array<i64: 1, 128>}, {pipeline_mode = #tpu.pipeline_mode<synchronous>, transform_indices = @transform_3, window_bounds = array<i64: 128, 128>}, {pipeline_mode = #tpu.pipeline_mode<synchronous>, transform_indices = @transform_4, window_bounds = array<i64: 1, 128>}, {transform_indices = @transform_5, window_bounds = array<i64: 16, 128>}]} {
    %c0 = arith.constant 0 : index
    %c0_0 = arith.constant 0 : index
    %0 = vector.load %arg1[%c0, %c0_0] : memref<16x128xbf16, #tpu.memory_space<vmem>>, vector<16x128xbf16>
    %c0_1 = arith.constant 0 : index
    %c0_2 = arith.constant 0 : index
    %1 = vector.load %arg5[%c0_1, %c0_2] : memref<1x128xf32, #tpu.memory_space<vmem>>, vector<1x128xf32>
    %2 = vector.shape_cast %1 : vector<1x128xf32> to vector<1x128xf32>
    %3 = vector.broadcast %2 : vector<1x128xf32> to vector<16x128xf32>
    %c0_3 = arith.constant 0 : index
    %c0_4 = arith.constant 0 : index
    %4 = vector.load %arg7[%c0_3, %c0_4] : memref<16x128xf32, #tpu.memory_space<vmem>>, vector<16x128xf32>
    tpu.vector_store %arg7[%c0_3, %c0_4], %3 {strides = array<i32>} : memref<16x128xf32, #tpu.memory_space<vmem>>, vector<16x128xf32>,
    %c0_5 = arith.constant 0 : index
    %c0_6 = arith.constant 0 : index
    %5 = vector.load %arg2[%c0_5, %c0_6] : memref<128x128xbf16, #tpu.memory_space<vmem>>, vector<128x128xbf16>
    %cst = arith.constant dense<0.000000e+00> : vector<16x128xf32>
    %6 = tpu.matmul %0, %5, %cst {dimension_numbers = #tpu.dot_dimension_numbers<[1], [0], [0], [1], [0, 0, 1, 1], [], []>} : vector<16x128xbf16>, vector<128x128xbf16>, vector<16x128xf32> -> vector<16x128xf32>
    %c0_7 = arith.constant 0 : index
    %c0_8 = arith.constant 0 : index
    %7 = vector.load %arg3[%c0_7, %c0_8] : memref<1x128xf32, #tpu.memory_space<vmem>>, vector<1x128xf32>
    %8 = vector.broadcast %7 : vector<1x128xf32> to vector<16x128xf32>
    %9 = arith.addf %6, %8 : vector<16x128xf32>
    %cst_9 = arith.constant 5.000000e-01 : f32
    %10 = vector.broadcast %cst_9 : f32 to vector<16x128xf32>
    %11 = arith.mulf %10, %9 : vector<16x128xf32>
    %cst_10 = arith.constant 0.707106769 : f32
    %12 = vector.broadcast %cst_10 : f32 to vector<16x128xf32>
    %13 = arith.mulf %9, %12 : vector<16x128xf32>
    %14 = math.erf %13 : vector<16x128xf32>
    %cst_11 = arith.constant 1.000000e+00 : f32
    %15 = vector.broadcast %cst_11 : f32 to vector<16x128xf32>
    %16 = arith.addf %15, %14 : vector<16x128xf32>
    %17 = arith.mulf %11, %16 : vector<16x128xf32>
    %18 = arith.truncf %17 : vector<16x128xf32> to vector<16x128xbf16>
    %c0_12 = arith.constant 0 : index
    %c0_13 = arith.constant 0 : index
    %19 = vector.load %arg4[%c0_12, %c0_13] : memref<128x128xbf16, #tpu.memory_space<vmem>>, vector<128x128xbf16>
    %c0_14 = arith.constant 0 : index
    %c0_15 = arith.constant 0 : index
    %20 = vector.load %arg7[%c0_14, %c0_15] : memref<16x128xf32, #tpu.memory_space<vmem>>, vector<16x128xf32>
    %cst_16 = arith.constant dense<0.000000e+00> : vector<16x128xf32>
    %21 = tpu.matmul %18, %19, %cst_16 {dimension_numbers = #tpu.dot_dimension_numbers<[1], [0], [0], [1], [0, 0, 1, 1], [], []>} : vector<16x128xbf16>, vector<128x128xbf16>, vector<16x128xf32> -> vector<16x128xf32>
    %22 = arith.addf %20, %21 : vector<16x128xf32>
    %c0_17 = arith.constant 0 : index
    %c0_18 = arith.constant 0 : index
    %23 = vector.load %arg7[%c0_17, %c0_18] : memref<16x128xf32, #tpu.memory_space<vmem>>, vector<16x128xf32>
    tpu.vector_store %arg7[%c0_17, %c0_18], %22 {strides = array<i32>} : memref<16x128xf32, #tpu.memory_space<vmem>>, vector<16x128xf32>,
    %c0_19 = arith.constant 0 : index
    %c0_20 = arith.constant 0 : index
    %24 = vector.load %arg7[%c0_19, %c0_20] : memref<16x128xf32, #tpu.memory_space<vmem>>, vector<16x128xf32>
    %c0_21 = arith.constant 0 : index
    %c0_22 = arith.constant 0 : index
    %25 = vector.load %arg6[%c0_21, %c0_22] : memref<16x128xf32, #tpu.memory_space<vmem>>, vector<16x128xf32>
    tpu.vector_store %arg6[%c0_21, %c0_22], %24 {strides = array<i32>} : memref<16x128xf32, #tpu.memory_space<vmem>>, vector<16x128xf32>,
    return
  }
  func.func @transform_0(%arg0: i32) -> (i32, i32) {
    %c0_i32 = arith.constant 0 : i32
    %c0_i32_0 = arith.constant 0 : i32
    return %arg0, %c0_i32 : i32, i32
  }
  func.func @transform_1(%arg0: i32) -> (i32, i32) {
    %c0_i32 = arith.constant 0 : i32
    %c0_i32_0 = arith.constant 0 : i32
    %c0_i32_1 = arith.constant 0 : i32
    return %c0_i32, %c0_i32_0 : i32, i32
  }
  func.func @transform_2(%arg0: i32) -> (i32, i32) {
    %c0_i32 = arith.constant 0 : i32
    %c0_i32_0 = arith.constant 0 : i32
    %c0_i32_1 = arith.constant 0 : i32
    return %c0_i32, %c0_i32_0 : i32, i32
  }
  func.func @transform_3(%arg0: i32) -> (i32, i32) {
    %c0_i32 = arith.constant 0 : i32
    %c0_i32_0 = arith.constant 0 : i32
    %c0_i32_1 = arith.constant 0 : i32
    return %c0_i32, %c0_i32_0 : i32, i32
  }
  func.func @transform_4(%arg0: i32) -> (i32, i32) {
    %c0_i32 = arith.constant 0 : i32
    %c0_i32_0 = arith.constant 0 : i32
    %c0_i32_1 = arith.constant 0 : i32
    return %c0_i32, %c0_i32_0 : i32, i32
  }
  func.func @transform_5(%arg0: i32) -> (i32, i32) {
    %c0_i32 = arith.constant 0 : i32
    %c0_i32_0 = arith.constant 0 : i32
    return %arg0, %c0_i32 : i32, i32
  }
}

</mosaic_0001>

<llo_original>
// kernel: mlp_pallas.1
$region0: #{mlp_pallas.1}
  #allocation0 [shape = 'u32[]', space=smem, size = 0x4, offset = 0x4, fixed_abs, tag = 'smem constant byte address 0x4 - core index']
  #allocation1 [shape = 'u32[144,128]{1,0:T(1,128)}', space=vmem, size = 0x12000, scoped, tag = 'internal scratch']
  #allocation2 [shape = 'f32[16,128]{1,0:T(8,128)}', space=vmem, size = 0x2000, scoped, tag = 'scratch operand']
  %s0 = inlined_call_operand.vmem [shape: bf16[16,128], index: 0, kind: input, shape index: {}]
  %s1 = inlined_call_operand.hbm [shape: bf16[128,128], index: 1, kind: input, shape index: {}]
  %s2 = inlined_call_operand.vmem [shape: f32[1,128], index: 2, kind: input, shape index: {}]
  %s3 = inlined_call_operand.hbm [shape: bf16[128,128], index: 3, kind: input, shape index: {}]
  %s4 = inlined_call_operand.vmem [shape: f32[1,128], index: 4, kind: input, shape index: {}]
  %s5 = inlined_call_operand.hbm [shape: f32[16,128], index: 5, kind: output, shape index: {}]
  %s6 = sld [smem:[#allocation0]]
  $region38: #{mlp_pallas.1} parent=0
    _
  %s8 = ssub.s32 1, %s6
  %s9 = scalar_select 0, %s8, %s6
  $region1: #{mlp_pallas.1} parent=0
    #allocation3 [shape = 'u8[32768]{0}', space=vmem, size = 0x8000, scoped, tag = 'input window, operand 1, single buffered']
    #allocation4 [shape = 's32[1]{0}', space=sflag, size = 0x4, scoped, tag = 'scoped memory for mlp_pallas.1']
    #allocation5 [shape = 's32[1]{0}', space=sflag, size = 0x4, scoped, tag = 'scoped memory for mlp_pallas.1']
    #allocation6 [shape = 'u8[32768]{0}', space=vmem, size = 0x8000, scoped, tag = 'input window, operand 3, single buffered']
    #allocation7 [shape = 's32[1]{0}', space=sflag, size = 0x4, scoped, tag = 'scoped memory for mlp_pallas.1']
    #allocation8 [shape = 'u8[8192]{0}', space=vmem, size = 0x2000, scoped, tag = 'output window, operand 0, single buffered']
    %10 = vsyncpa [#allocation4], 0
    %11 = vsyncpa [#allocation7], 0
    %12 = vsyncpa [#allocation5], 0
    // Predicated region
    $region2: #{mlp_pallas.1} parent=1 // pred_check
      _
    $region3: #{mlp_pallas.1} parent=1 // pred_check_branch
      %14 = sbr.rel (0) target = $region5
    $region4: #{mlp_pallas.1} parent=1 // pred_region
      _
    $region5: #{mlp_pallas.1} parent=1 // pred_fallthru
      _
    // Predicated region
    $region6: #{mlp_pallas.1} parent=1 // pred_check
      _
    $region7: #{mlp_pallas.1} parent=1 // pred_check_branch
      %16 = sbr.rel (0) target = $region9
    $region8: #{mlp_pallas.1} parent=1 // pred_region
      %s18 = ssub.s32 1024, 1024
      %19 = vsyncadd [#allocation4], %s18
      %s20 = sshll.u32 [#allocation3], 4
      %s21 = int_to_ptr.vmem [resolvable:$true] %s20
      %26 = dma.hbm_to_vmem [thread:$0]  %s1, 1024, %s21, [#allocation4], 64, 64, 4
    $region9: #{mlp_pallas.1} parent=1 // pred_fallthru
      _
    // Predicated region
    $region10: #{mlp_pallas.1} parent=1 // pred_check
      _
    $region11: #{mlp_pallas.1} parent=1 // pred_check_branch
      %28 = sbr.rel (0) target = $region13
    $region12: #{mlp_pallas.1} parent=1 // pred_region
      _
    $region13: #{mlp_pallas.1} parent=1 // pred_fallthru
      _
    // Predicated region
    $region14: #{mlp_pallas.1} parent=1 // pred_check
      _
    $region15: #{mlp_pallas.1} parent=1 // pred_check_branch
      %30 = sbr.rel (0) target = $region17
    $region16: #{mlp_pallas.1} parent=1 // pred_region
      %s32 = ssub.s32 1024, 1024
      %33 = vsyncadd [#allocation7], %s32
      %s34 = sshll.u32 [#allocation6], 4
      %s35 = int_to_ptr.vmem [resolvable:$true] %s34
      %40 = dma.hbm_to_vmem [thread:$0]  %s3, 1024, %s35, [#allocation7], 64, 64, 4
    $region17: #{mlp_pallas.1} parent=1 // pred_fallthru
      _
    // Predicated region
    $region18: #{mlp_pallas.1} parent=1 // pred_check
      _
    $region19: #{mlp_pallas.1} parent=1 // pred_check_branch
      %42 = sbr.rel (0) target = $region21
    $region20: #{mlp_pallas.1} parent=1 // pred_region
      _
    $region21: #{mlp_pallas.1} parent=1 // pred_fallthru
      _
    // Predicated region
    $region22: #{mlp_pallas.1} parent=1 // pred_check
      _
    $region23: #{mlp_pallas.1} parent=1 // pred_check_branch
      %44 = sbr.rel (0) target = $region25
    $region24: #{mlp_pallas.1} parent=1 // pred_region
      %45 = dma.done [#allocation4], 1024
    $region25: #{mlp_pallas.1} parent=1 // pred_fallthru
      _
    // Predicated region
    $region26: #{mlp_pallas.1} parent=1 // pred_check
      _
    $region27: #{mlp_pallas.1} parent=1 // pred_check_branch
      %47 = sbr.rel (0) target = $region29
    $region28: #{mlp_pallas.1} parent=1 // pred_region
      %48 = dma.done [#allocation7], 1024
    $region29: #{mlp_pallas.1} parent=1 // pred_fallthru
      _
    %v50 = vld [vmem:[%s0] sm:$0xf]
    %v51 = vld [vmem:[%s0 + $0x4] sm:$0xf]
    %v52 = vld [vmem:[%s4] sm:$0x1]
    %v54 = vlaneseq
    %v55 = vshrl.u32 %v54, 7
    %v56 = vsub.s32 0, %v55
    %v57 = vrot.slane %v52, %v56
    %59 = vst [vmem:[#allocation2] sm:$0xff] %v57
    %60 = vst [vmem:[#allocation2 + $0x8] sm:$0xff] %v57
    %v61 = vld [vmem:[#allocation3] sm:$0xf]
    %v62 = vld [vmem:[#allocation3 + $0x4] sm:$0xf]
    %v63 = vld [vmem:[#allocation3 + $0x8] sm:$0xf]
    %v64 = vld [vmem:[#allocation3 + $0xc] sm:$0xf]
    %v65 = vld [vmem:[#allocation3 + $0x10] sm:$0xf]
    %v66 = vld [vmem:[#allocation3 + $0x14] sm:$0xf]
    %v67 = vld [vmem:[#allocation3 + $0x18] sm:$0xf]
    %v68 = vld [vmem:[#allocation3 + $0x1c] sm:$0xf]
    %v69 = vld [vmem:[#allocation3 + $0x20] sm:$0xf]
    %v70 = vld [vmem:[#allocation3 + $0x24] sm:$0xf]
    %v71 = vld [vmem:[#allocation3 + $0x28] sm:$0xf]
    %v72 = vld [vmem:[#allocation3 + $0x2c] sm:$0xf]
    %v73 = vld [vmem:[#allocation3 + $0x30] sm:$0xf]
    %v74 = vld [vmem:[#allocation3 + $0x34] sm:$0xf]
    %v75 = vld [vmem:[#allocation3 + $0x38] sm:$0xf]
    %v76 = vld [vmem:[#allocation3 + $0x3c] sm:$0xf]
    %v77 = vld [vmem:[%s2] sm:$0x1]
    %v79 = vlaneseq
    %v80 = vshrl.u32 %v79, 7
    %v81 = vsub.s32 0, %v80
    %v82 = vrot.slane %v77, %v81
    %v86 = vunpack.c.l.b16 %v50
    %v87 = vunpack.c.l.b16 %v51
    %v88 = vpack.c.b16 %v87, %v86
    %v106 = vunpack.c.l.b16 %v61
    %v107 = vunpack.c.l.b16 %v62
    %v108 = vunpack.c.l.b16 %v63
    %v109 = vunpack.c.l.b16 %v64
    %v110 = vunpack.c.l.b16 %v65
    %v111 = vunpack.c.l.b16 %v66
    %v112 = vunpack.c.l.b16 %v67
    %v113 = vunpack.c.l.b16 %v68
    %v114 = vunpack.c.l.b16 %v69
    %v115 = vunpack.c.l.b16 %v70
    %v116 = vunpack.c.l.b16 %v71
    %v117 = vunpack.c.l.b16 %v72
    %v118 = vunpack.c.l.b16 %v73
    %v119 = vunpack.c.l.b16 %v74
    %v120 = vunpack.c.l.b16 %v75
    %v121 = vunpack.c.l.b16 %v76
    %v122 = vpack.c.b16 %v107, %v106
    %v123 = vpack.c.b16 %v109, %v108
    %v124 = vpack.c.b16 %v111, %v110
    %v125 = vpack.c.b16 %v113, %v112
    %v126 = vpack.c.b16 %v115, %v114
    %v127 = vpack.c.b16 %v117, %v116
    %v128 = vpack.c.b16 %v119, %v118
    %v129 = vpack.c.b16 %v121, %v120
    %138 = vmatprep.subr.bf16.mxu0 0
    %139 = vmatpush1.bf16.msra.mxu0 %v129
    %140 = vmatprep.subr.bf16.mxu0 0
    %141 = vmatpush1.bf16.msra.mxu0 %v128
    %142 = vmatprep.subr.bf16.mxu0 0
    %143 = vmatpush1.bf16.msra.mxu0 %v127
    %144 = vmatprep.subr.bf16.mxu0 0
    %145 = vmatpush1.bf16.msra.mxu0 %v126
    %146 = vmatprep.subr.bf16.mxu0 0
    %147 = vmatpush1.bf16.msra.mxu0 %v125
    %148 = vmatprep.subr.bf16.mxu0 0
    %149 = vmatpush1.bf16.msra.mxu0 %v124
    %150 = vmatprep.subr.bf16.mxu0 0
    %151 = vmatpush1.bf16.msra.mxu0 %v123
    %152 = vmatprep.subr.bf16.mxu0 0
    %153 = vmatpush1.bf16.msra.mxu0 %v122
    %154 = vmatprep.subr.bf16.mxu0 0
    %155 = vmatpush2.bf16.msra.mxu0 0
    %156 = vmatprep.subr.bf16.mxu0 0
    %157 = vmatpush2.bf16.msra.mxu0 0
    %158 = vmatprep.subr.bf16.mxu0 0
    %159 = vmatpush2.bf16.msra.mxu0 0
    %160 = vmatprep.subr.bf16.mxu0 0
    %161 = vmatpush2.bf16.msra.mxu0 0
    %162 = vmatprep.subr.bf16.mxu0 0
    %163 = vmatpush2.bf16.msra.mxu0 0
    %164 = vmatprep.subr.bf16.mxu0 0
    %165 = vmatpush2.bf16.msra.mxu0 0
    %166 = vmatprep.subr.bf16.mxu0 0
    %167 = vmatpush2.bf16.msra.mxu0 0
    %168 = vmatprep.subr.bf16.mxu0 0
    %169 = vmatpush2.bf16.msra.mxu0 0
    %170 = vmatprep.mubr.bf16.mxu0 0
    %171 = vmatmul.mubr.bf16.gmra.mxu0 %v88
    %v172 = vpop.f32.mrf.mxu0
    %v173 = vadd.f32 %v82, %v172
    %v174 = vpop.f32.mrf.mxu0
    %v175 = vpop.f32.mrf.mxu0
    %v176 = vadd.f32 %v82, %v175
    %v177 = vpop.f32.mrf.mxu0
    %178 = vdwg.mxu0
    %v179 = vmul.f32 %v173, 0.5
    %v180 = vmul.f32 %v176, 0.5
    %v181 = vmul.f32 %v173, 0.70710677
    %v182 = vmul.f32 %v176, 0.70710677
    %v183 = verf.f32.pop %v181
    %v184 = verf.f32.pop %v182
    %v185 = vadd.f32 %v183, 1.0
    %v186 = vadd.f32 %v184, 1.0
    %v187 = vmul.f32 %v179, %v185
    %v188 = vmul.f32 %v180, %v186
    %v189 = vpack.c.bf16 %v188, %v187
    %v190 = vld [vmem:[#allocation6] sm:$0xf]
    %v191 = vld [vmem:[#allocation6 + $0x4] sm:$0xf]
    %v192 = vld [vmem:[#allocation6 + $0x8] sm:$0xf]
    %v193 = vld [vmem:[#allocation6 + $0xc] sm:$0xf]
    %v194 = vld [vmem:[#allocation6 + $0x10] sm:$0xf]
    %v195 = vld [vmem:[#allocation6 + $0x14] sm:$0xf]
    %v196 = vld [vmem:[#allocation6 + $0x18] sm:$0xf]
    %v197 = vld [vmem:[#allocation6 + $0x1c] sm:$0xf]
    %v198 = vld [vmem:[#allocation6 + $0x20] sm:$0xf]
    %v199 = vld [vmem:[#allocation6 + $0x24] sm:$0xf]
    %v200 = vld [vmem:[#allocation6 + $0x28] sm:$0xf]
    %v201 = vld [vmem:[#allocation6 + $0x2c] sm:$0xf]
    %v202 = vld [vmem:[#allocation6 + $0x30] sm:$0xf]
    %v203 = vld [vmem:[#allocation6 + $0x34] sm:$0xf]
    %v204 = vld [vmem:[#allocation6 + $0x38] sm:$0xf]
    %v205 = vld [vmem:[#allocation6 + $0x3c] sm:$0xf]
    %v206 = vld [vmem:[#allocation2] sm:$0xff]
    %v207 = vld [vmem:[#allocation2 + $0x8] sm:$0xff]
    %v224 = vunpack.c.l.b16 %v190
    %v225 = vunpack.c.l.b16 %v191
    %v226 = vunpack.c.l.b16 %v192
    %v227 = vunpack.c.l.b16 %v193
    %v228 = vunpack.c.l.b16 %v194
    %v229 = vunpack.c.l.b16 %v195
    %v230 = vunpack.c.l.b16 %v196
    %v231 = vunpack.c.l.b16 %v197
    %v232 = vunpack.c.l.b16 %v198
    %v233 = vunpack.c.l.b16 %v199
    %v234 = vunpack.c.l.b16 %v200
    %v235 = vunpack.c.l.b16 %v201
    %v236 = vunpack.c.l.b16 %v202
    %v237 = vunpack.c.l.b16 %v203
    %v238 = vunpack.c.l.b16 %v204
    %v239 = vunpack.c.l.b16 %v205
    %v240 = vpack.c.b16 %v225, %v224
    %v241 = vpack.c.b16 %v227, %v226
    %v242 = vpack.c.b16 %v229, %v228
    %v243 = vpack.c.b16 %v231, %v230
    %v244 = vpack.c.b16 %v233, %v232
    %v245 = vpack.c.b16 %v235, %v234
    %v246 = vpack.c.b16 %v237, %v236
    %v247 = vpack.c.b16 %v239, %v238
    %256 = vmatprep.subr.bf16.mxu0 0
    %257 = vmatpush1.bf16.msra.mxu0 %v247
    %258 = vmatprep.subr.bf16.mxu0 0
    %259 = vmatpush1.bf16.msra.mxu0 %v246
    %260 = vmatprep.subr.bf16.mxu0 0
    %261 = vmatpush1.bf16.msra.mxu0 %v245
    %262 = vmatprep.subr.bf16.mxu0 0
    %263 = vmatpush1.bf16.msra.mxu0 %v244
    %264 = vmatprep.subr.bf16.mxu0 0
    %265 = vmatpush1.bf16.msra.mxu0 %v243
    %266 = vmatprep.subr.bf16.mxu0 0
    %267 = vmatpush1.bf16.msra.mxu0 %v242
    %268 = vmatprep.subr.bf16.mxu0 0
    %269 = vmatpush1.bf16.msra.mxu0 %v241
    %270 = vmatprep.subr.bf16.mxu0 0
    %271 = vmatpush1.bf16.msra.mxu0 %v240
    %272 = vmatprep.subr.bf16.mxu0 0
    %273 = vmatpush2.bf16.msra.mxu0 0
    %274 = vmatprep.subr.bf16.mxu0 0
    %275 = vmatpush2.bf16.msra.mxu0 0
    %276 = vmatprep.subr.bf16.mxu0 0
    %277 = vmatpush2.bf16.msra.mxu0 0
    %278 = vmatprep.subr.bf16.mxu0 0
    %279 = vmatpush2.bf16.msra.mxu0 0
    %280 = vmatprep.subr.bf16.mxu0 0
    %281 = vmatpush2.bf16.msra.mxu0 0
    %282 = vmatprep.subr.bf16.mxu0 0
    %283 = vmatpush2.bf16.msra.mxu0 0
    %284 = vmatprep.subr.bf16.mxu0 0
    %285 = vmatpush2.bf16.msra.mxu0 0
    %286 = vmatprep.subr.bf16.mxu0 0
    %287 = vmatpush2.bf16.msra.mxu0 0
    %288 = vmatprep.mubr.bf16.mxu0 0
    %289 = vmatmul.mubr.bf16.gmra.mxu0 %v189
    %v290 = vpop.f32.mrf.mxu0
    %v291 = vadd.f32 0.0, %v290
    %v292 = vpop.f32.mrf.mxu0
    %v293 = vpop.f32.mrf.mxu0
    %v294 = vadd.f32 0.0, %v293
    %v295 = vpop.f32.mrf.mxu0
    %296 = vdwg.mxu0
    %v297 = vadd.f32 %v206, %v291
    %v298 = vadd.f32 %v207, %v294
    %299 = vst [vmem:[#allocation2] sm:$0xff] %v297
    %300 = vst [vmem:[#allocation2 + $0x8] sm:$0xff] %v298
    %v301 = vld [vmem:[#allocation2] sm:$0xff]
    %v302 = vld [vmem:[#allocation2 + $0x8] sm:$0xff]
    %303 = vst [vmem:[#allocation8] sm:$0xff] %v301
    %304 = vst [vmem:[#allocation8 + $0x8] sm:$0xff] %v302
    // Predicated region
    $region30: #{mlp_pallas.1} parent=1 // pred_check
      _
    $region31: #{mlp_pallas.1} parent=1 // pred_check_branch
      %306 = sbr.rel (0) target = $region33
    $region32: #{mlp_pallas.1} parent=1 // pred_region
      %s308 = ssub.s32 256, 256
      %309 = vsyncadd [#allocation5], %s308
      %s310 = sshll.u32 [#allocation8], 4
      %s311 = int_to_ptr.vmem [resolvable:$true] %s310
      %316 = dma.vmem_to_hbm [thread:$0]  %s311, 256, %s5, [#allocation5], 128, 128, 8
    $region33: #{mlp_pallas.1} parent=1 // pred_fallthru
      _
    // Predicated region
    $region34: #{mlp_pallas.1} parent=1 // pred_check
      _
    $region35: #{mlp_pallas.1} parent=1 // pred_check_branch
      %318 = sbr.rel (0) target = $region37
    $region36: #{mlp_pallas.1} parent=1 // pred_region
      %319 = dma.done [#allocation5], 256
    $region37: #{mlp_pallas.1} parent=1 // pred_fallthru
      _
    %320 = vsyncpa [#allocation4], 1
    %321 = vsyncpa [#allocation7], 1
    %322 = vsyncpa [#allocation5], 1

</llo_original>
